<compile_context>
chip_gen: v6e
topology: v6e:2x2x1
jax: 0.10.0
libtpu: 0.0.40
codegen_flags: <defaults>
</compile_context>

<pallas_src>
import functools

import jax
import jax.numpy as jnp
from jax.experimental import pallas as pl
from jax.experimental.pallas import tpu as pltpu

LANES = 128
FOLD_K_MAX = 256          # folded-K patch path when KH*KW*Cin <= this
BN_EPS = 1e-5


# ------------------------------- small utils --------------------------------

def _round_up(x, m):
    return (x + m - 1) // m * m


def _ds(start, size, stride=1):
    return pl.ds(start, size) if stride == 1 else pl.ds(start, size, stride)


@functools.lru_cache(maxsize=None)
def _vmem_limit():
    # Per-generation scoped-VMEM budget (review): ~96 MiB on v5e/v6e (128 MiB
    # physical), ~48 MiB on v7x (64 MiB physical).
    try:
        cap = pltpu.get_tpu_info().vmem_capacity_bytes
        return int(min(96 * 1024 * 1024, max(32 * 1024 * 1024, cap * 3 // 4)))
    except Exception:
        return 48 * 1024 * 1024


def _compiler_params():
    return pltpu.CompilerParams(dimension_semantics=("parallel",),
                                vmem_limit_bytes=_vmem_limit())


def _batch_tile(n):
    # >= 2 grid steps whenever possible: the "parallel" axis is what feeds
    # both v7x TensorCores and gives the pipeline DMA/compute overlap.
    if n <= 1:
        return 1
    return max(1, min(8, n // 2))


def _row_tile(m, target=512):
    # Big lane-dense tiles (512 rows ~ HBM roofline on v6e, still inside the
    # v7x budget), but keep >= 2 grid steps.
    if m <= 8:
        return m
    half = _round_up(pl.cdiv(m, 2), 8)
    return max(8, min(target, half))


# ------------------------------ Pallas kernels -------------------------------
# In-kernel-im2col path (wide layers): input block is (bt, Hp, Wp, Cin_p).

def _tap_conv1_kernel(stride, with_sc, *refs):
    """bn1+ReLU prologue -> 3x3 conv (9 tap dots) -> bn2+ReLU epilogue,
    optionally a fused 1x1 projection-shortcut dot as a second output."""
    if with_sc:
        (x_ref, m_ref, s1_ref, b1_ref, w_ref, wsc_ref, s2_ref, b2_ref,
         y_ref, sc_ref, a_scr) = refs
    else:
        (x_ref, m_ref, s1_ref, b1_ref, w_ref, s2_ref, b2_ref,
         y_ref, a_scr) = refs
        wsc_ref = sc_ref = None

    # bn1 + ReLU in f32; the spatial zero-pad border is forced back to 0 by
    # the mask (relu(0*scale+shift) is not 0 in general).
    a = jnp.maximum(x_ref[...].astype(jnp.float32) * s1_ref[...] + b1_ref[...],
                    0.0)
    a = a * m_ref[...]
    a_scr[...] = a.astype(a_scr.dtype)

    bt, ho, wo, coutp = y_ref.shape
    cinp = a_scr.shape[-1]
    kh_n, kw_n = w_ref.shape[0], w_ref.shape[1]
    m = bt * ho * wo

    acc = jnp.zeros((m, coutp), jnp.float32)
    for kh in range(kh_n):
        for kw in range(kw_n):
            tap = a_scr[:, _ds(kh, ho, stride), _ds(kw, wo, stride), :]
            acc = acc + jnp.dot(tap.reshape(m, cinp), w_ref[kh, kw, :, :],
                                preferred_element_type=jnp.float32)

    y = jnp.maximum(acc * s2_ref[...] + b2_ref[...], 0.0)
    y_ref[...] = y.reshape(bt, ho, wo, coutp).astype(y_ref.dtype)

    if with_sc:
        pad = (kh_n - 1) // 2
        ctap = a_scr[:, _ds(pad, ho, stride), _ds(pad, wo, stride), :]
        sc = jnp.dot(ctap.reshape(m, cinp), wsc_ref[...],
                     preferred_element_type=jnp.float32)
        sc_ref[...] = sc.reshape(bt, ho, wo, coutp).astype(sc_ref.dtype)


def _tap_conv2_kernel(x_ref, w_ref, r_ref, o_ref):
    """3x3 stride-1 conv (in-kernel im2col) with fused residual add."""
    bt, ho, wo, coutp = o_ref.shape
    cinp = x_ref.shape[-1]
    kh_n, kw_n = w_ref.shape[0], w_ref.shape[1]
    m = bt * ho * wo

    acc = jnp.zeros((m, coutp), jnp.float32)
    for kh in range(kh_n):
        for kw in range(kw_n):
            tap = x_ref[:, pl.ds(kh, ho), pl.ds(kw, wo), :]
            acc = acc + jnp.dot(tap.reshape(m, cinp), w_ref[kh, kw, :, :],
                                preferred_element_type=jnp.float32)

    out = acc + r_ref[...].reshape(m, coutp).astype(jnp.float32)
    o_ref[...] = out.reshape(bt, ho, wo, coutp).astype(o_ref.dtype)


# Folded-K path (narrow layers): contraction = KH*KW*Cin padded to 128/256.

def _fold_conv1_kernel(with_sc, *refs):
    if with_sc:
        p_ref, w_ref, wsc_ref, s2_ref, b2_ref, y_ref, sc_ref = refs
    else:
        p_ref, w_ref, s2_ref, b2_ref, y_ref = refs
        wsc_ref = sc_ref = None
    p = p_ref[...]
    acc = jnp.dot(p, w_ref[...], preferred_element_type=jnp.float32)
    y_ref[...] = jnp.maximum(acc * s2_ref[...] + b2_ref[...],
                             0.0).astype(y_ref.dtype)
    if with_sc:
        # 1x1 shortcut weight is embedded at the centre-tap rows of a zero
        # (Kcp, Coutp) matrix -> one extra MXU dot on the same patch operand.
        sc = jnp.dot(p, wsc_ref[...], preferred_element_type=jnp.float32)
        sc_ref[...] = sc.astype(sc_ref.dtype)


def _fold_conv2_kernel(p_ref, w_ref, r_ref, o_ref):
    acc = jnp.dot(p_ref[...], w_ref[...], preferred_element_type=jnp.float32)
    o_ref[...] = (acc + r_ref[...].astype(jnp.float32)).astype(o_ref.dtype)


# ------------------------------ conv wrappers --------------------------------

def _im2col(x_sp, ho, wo, stride, kh_n, kw_n):
    """(N, Hp, Wp, C) spatially padded -> (N*ho*wo, kh_n*kw_n*C) patches."""
    n, _, _, c = x_sp.shape
    cols = []
    for kh in range(kh_n):
        for kw in range(kw_n):
            sl = x_sp[:, kh:kh + stride * (ho - 1) + 1:stride,
                      kw:kw + stride * (wo - 1) + 1:stride, :]
            cols.append(sl.reshape(n * ho * wo, c))
    return jnp.concatenate(cols, axis=1)


def conv1_tap(x, w1, wsc, s1, b1, s2, b2, stride):
    """Wide-layer conv1: in-kernel im2col, bn1 prologue, bn2+ReLU epilogue,
    optional fused 1x1 shortcut.  Returns (y2, sc) in padded NHWC bf16."""
    n, h, w, cin = x.shape
    cout = w1.shape[0]
    cinp, coutp = _round_up(cin, LANES), _round_up(cout, LANES)
    kh_n = kw_n = 3
    pad = 1
    ho = (h + 2 * pad - kh_n) // stride + 1
    wo = (w + 2 * pad - kw_n) // stride + 1
    hp, wp = h + 2 * pad, w + 2 * pad

    x_p = jnp.pad(x, ((0, 0), (pad, pad), (pad, pad), (0, cinp - cin)))
    mask = jnp.pad(jnp.ones((1, h, w, 1), jnp.float32),
                   ((0, 0), (pad, pad), (pad, pad), (0, 0)))
    s1p = jnp.pad(s1, (0, cinp - cin)).reshape(1, cinp).astype(jnp.float32)
    b1p = jnp.pad(b1, (0, cinp - cin)).reshape(1, cinp).astype(jnp.float32)
    s2p = jnp.pad(s2, (0, coutp - cout)).reshape(1, coutp).astype(jnp.float32)
    b2p = jnp.pad(b2, (0, coutp - cout)).reshape(1, coutp).astype(jnp.float32)
    w4 = jnp.transpose(w1, (2, 3, 1, 0))                       # (3,3,Cin,Cout)
    w4 = jnp.pad(w4, ((0, 0), (0, 0), (0, cinp - cin),
                      (0, coutp - cout))).astype(jnp.bfloat16)

    bt = _batch_tile(n)
    grid = (pl.cdiv(n, bt),)
    x_spec = pl.BlockSpec((bt, hp, wp, cinp), lambda i: (i, 0, 0, 0))
    m_spec = pl.BlockSpec((1, hp, wp, 1), lambda i: (0, 0, 0, 0))
    c1_spec = pl.BlockSpec((1, cinp), lambda i: (0, 0))
    c2_spec = pl.BlockSpec((1, coutp), lambda i: (0, 0))
    # Constant index_map -> weights stay VMEM resident across the batch grid.
    # (Could be single-buffered with pipeline_mode=pl.Buffered(1) to save VMEM
    #  on v7x; left default-buffered here for portability.)
    w_spec = pl.BlockSpec((kh_n, kw_n, cinp, coutp), lambda i: (0, 0, 0, 0))
    y_spec = pl.BlockSpec((bt, ho, wo, coutp), lambda i: (i, 0, 0, 0))
    scratch = [pltpu.VMEM((bt, hp, wp, cinp), jnp.bfloat16)]

    if wsc is not None:
        wsc2 = jnp.transpose(wsc[:, :, 0, 0], (1, 0))           # (Cin, Cout)
        wsc2 = jnp.pad(wsc2, ((0, cinp - cin),
                              (0, coutp - cout))).astype(jnp.bfloat16)
        wsc_spec = pl.BlockSpec((cinp, coutp), lambda i: (0, 0))
        y2, sc = pl.pallas_call(
            functools.partial(_tap_conv1_kernel, stride, True),
            out_shape=(jax.ShapeDtypeStruct((n, ho, wo, coutp), jnp.bfloat16),
                       jax.ShapeDtypeStruct((n, ho, wo, coutp), jnp.bfloat16)),
            grid=grid,
            in_specs=[x_spec, m_spec, c1_spec, c1_spec, w_spec, wsc_spec,
                      c2_spec, c2_spec],
            out_specs=(y_spec, y_spec),
            scratch_shapes=scratch,
            compiler_params=_compiler_params(),
        )(x_p, mask, s1p, b1p, w4, wsc2, s2p, b2p)
        return y2, sc

    y2 = pl.pallas_call(
        functools.partial(_tap_conv1_kernel, stride, False),
        out_shape=jax.ShapeDtypeStruct((n, ho, wo, coutp), jnp.bfloat16),
        grid=grid,
        in_specs=[x_spec, m_spec, c1_spec, c1_spec, w_spec, c2_spec, c2_spec],
        out_specs=y_spec,
        scratch_shapes=scratch,
        compiler_params=_compiler_params(),
    )(x_p, mask, s1p, b1p, w4, s2p, b2p)
    return y2, None


def conv2_tap(y2, res, w2):
    """Wide-layer conv2 (3x3, stride 1) with fused residual add."""
    n, ho, wo, coutp = y2.shape
    cout, cin2, kh_n, kw_n = w2.shape
    pad = 1
    hp, wp = ho + 2 * pad, wo + 2 * pad
    y2p = jnp.pad(y2, ((0, 0), (pad, pad), (pad, pad), (0, 0)))
    w4 = jnp.transpose(w2, (2, 3, 1, 0))
    w4 = jnp.pad(w4, ((0, 0), (0, 0), (0, coutp - cin2),
                      (0, coutp - cout))).astype(jnp.bfloat16)

    bt = _batch_tile(n)
    grid = (pl.cdiv(n, bt),)
    return pl.pallas_call(
        _tap_conv2_kernel,
        out_shape=jax.ShapeDtypeStruct((n, ho, wo, coutp), jnp.float32),
        grid=grid,
        in_specs=[pl.BlockSpec((bt, hp, wp, coutp), lambda i: (i, 0, 0, 0)),
                  pl.BlockSpec((kh_n, kw_n, coutp, coutp),
                               lambda i: (0, 0, 0, 0)),
                  pl.BlockSpec((bt, ho, wo, coutp), lambda i: (i, 0, 0, 0))],
        out_specs=pl.BlockSpec((bt, ho, wo, coutp), lambda i: (i, 0, 0, 0)),
        compiler_params=_compiler_params(),
    )(y2p, w4, res)


def conv1_folded(x, w1, wsc, s1, b1, s2, b2, stride):
    """Narrow-layer conv1: folded K = 9*Cin padded to 128/256 (not Cin->128)."""
    n, h, w, cin = x.shape
    cout = w1.shape[0]
    coutp = _round_up(cout, LANES)
    kh_n = kw_n = 3
    pad = 1
    ho = (h + 2 * pad - kh_n) // stride + 1
    wo = (w + 2 * pad - kw_n) // stride + 1
    m = n * ho * wo
    kc = kh_n * kw_n * cin
    kcp = _round_up(kc, LANES)

    # bn1+ReLU on the raw input (XLA fuses it into the patch gather, so the
    # padded border correctly stays 0), then fold the taps into K.
    a1 = jnp.maximum(x * s1 + b1, 0.0)
    a1 = jnp.pad(a1, ((0, 0), (pad, pad), (pad, pad), (0, 0)))
    patches = _im2col(a1, ho, wo, stride, kh_n, kw_n).astype(jnp.bfloat16)
    patches = jnp.pad(patches, ((0, 0), (0, kcp - kc)))

    w2d = jnp.transpose(w1, (2, 3, 1, 0)).reshape(kc, cout)
    w2d = jnp.pad(w2d, ((0, kcp - kc), (0, coutp - cout))).astype(jnp.bfloat16)
    s2p = jnp.pad(s2, (0, coutp - cout)).reshape(1, coutp).astype(jnp.float32)
    b2p = jnp.pad(b2, (0, coutp - cout)).reshape(1, coutp).astype(jnp.float32)

    tm = _row_tile(m)
    grid = (pl.cdiv(m, tm),)
    p_spec = pl.BlockSpec((tm, kcp), lambda i: (i, 0))
    w_spec = pl.BlockSpec((kcp, coutp), lambda i: (0, 0))      # VMEM resident
    v_spec = pl.BlockSpec((1, coutp), lambda i: (0, 0))
    o_spec = pl.BlockSpec((tm, coutp), lambda i: (i, 0))

    if wsc is not None:
        wsc2 = jnp.transpose(wsc[:, :, 0, 0], (1, 0))           # (Cin, Cout)
        ctr = (kh_n // 2) * kw_n + (kw_n // 2)
        wsc_full = jnp.zeros((kcp, coutp), jnp.float32).at[
            ctr * cin:(ctr + 1) * cin, :cout].set(wsc2).astype(jnp.bfloat16)
        y2, sc = pl.pallas_call(
            functools.partial(_fold_conv1_kernel, True),
            out_shape=(jax.ShapeDtypeStruct((m, coutp), jnp.bfloat16),
                       jax.ShapeDtypeStruct((m, coutp), jnp.bfloat16)),
            grid=grid,
            in_specs=[p_spec, w_spec, w_spec, v_spec, v_spec],
            out_specs=(o_spec, o_spec),
            compiler_params=_compiler_params(),
        )(patches, w2d, wsc_full, s2p, b2p)
        return (y2.reshape(n, ho, wo, coutp), sc.reshape(n, ho, wo, coutp))

    y2 = pl.pallas_call(
        functools.partial(_fold_conv1_kernel, False),
        out_shape=jax.ShapeDtypeStruct((m, coutp), jnp.bfloat16),
        grid=grid,
        in_specs=[p_spec, w_spec, v_spec, v_spec],
        out_specs=o_spec,
        compiler_params=_compiler_params(),
    )(patches, w2d, s2p, b2p)
    return y2.reshape(n, ho, wo, coutp), None


def conv2_folded(y2, res, w2):
    """Narrow-layer conv2 (folded K) with fused residual add (bf16 stream)."""
    n, ho, wo, coutp = y2.shape
    cout, cin2, kh_n, kw_n = w2.shape
    pad = 1
    m = n * ho * wo
    kc = kh_n * kw_n * cin2
    kcp = _round_up(kc, LANES)

    y2p = jnp.pad(y2[..., :cin2], ((0, 0), (pad, pad), (pad, pad), (0, 0)))
    patches = _im2col(y2p, ho, wo, 1, kh_n, kw_n)
    patches = jnp.pad(patches, ((0, 0), (0, kcp - kc)))

    w2d = jnp.transpose(w2, (2, 3, 1, 0)).reshape(kc, cout)
    w2d = jnp.pad(w2d, ((0, kcp - kc), (0, coutp - cout))).astype(jnp.bfloat16)
    res2d = res.reshape(m, coutp)

    tm = _row_tile(m)
    grid = (pl.cdiv(m, tm),)
    out = pl.pallas_call(
        _fold_conv2_kernel,
        out_shape=jax.ShapeDtypeStruct((m, coutp), jnp.float32),
        grid=grid,
        in_specs=[pl.BlockSpec((tm, kcp), lambda i: (i, 0)),
                  pl.BlockSpec((kcp, coutp), lambda i: (0, 0)),
                  pl.BlockSpec((tm, coutp), lambda i: (i, 0))],
        out_specs=pl.BlockSpec((tm, coutp), lambda i: (i, 0)),
        compiler_params=_compiler_params(),
    )(patches, w2d, res2d)
    return out.reshape(n, ho, wo, coutp)


# ---------------------------- BasicBlock forward -----------------------------

def basic_block_forward(x_nchw, params, *, in_channels, out_channels, stride,
                        drop_rate):
    """Matches BasicBlock.forward (eval-mode BN; drop_rate must be 0)."""
    assert drop_rate == 0.0
    # TODO(synk): training-mode F.dropout (drop_rate > 0) not implemented.

    preact_both = in_channels != out_channels
    cout = out_channels
    coutp = _round_up(cout, LANES)

    # Layout conversion only at the module boundary (a full network would keep
    # padded NHWC between blocks).
    x = jnp.transpose(x_nchw, (0, 2, 3, 1))                    # NCHW -> NHWC
    _, _, _, cin = x.shape

    s1 = params["bn1_gamma"] * jax.lax.rsqrt(params["bn1_var"] + BN_EPS)
    b1 = params["bn1_beta"] - params["bn1_mean"] * s1
    s2 = params["bn2_gamma"] * jax.lax.rsqrt(params["bn2_var"] + BN_EPS)
    b2 = params["bn2_beta"] - params["bn2_mean"] * s2
    wsc = params["shortcut_w"] if preact_both else None

    # conv1 (+ fused bn1 prologue, bn2+ReLU epilogue, fused 1x1 shortcut).
    if 9 * cin <= FOLD_K_MAX:
        y2, sc = conv1_folded(x, params["conv1_w"], wsc, s1, b1, s2, b2, stride)
    else:
        y2, sc = conv1_tap(x, params["conv1_w"], wsc, s1, b1, s2, b2, stride)

    # Residual carried in bf16 (review): projection -> fused shortcut output,
    # identity -> the raw input x (channel padded).
    if preact_both:
        res = sc
    else:
        assert stride == 1, "identity shortcut requires stride == 1"
        res = jnp.pad(x, ((0, 0), (0, 0), (0, 0),
                          (0, coutp - cin))).astype(jnp.bfloat16)

    # conv2 with the skip add fused into its kernel.
    if 9 * cout <= FOLD_K_MAX:
        out = conv2_folded(y2, res, params["conv2_w"])
    else:
        out = conv2_tap(y2, res, params["conv2_w"])

    out = out[..., :cout]
    return jnp.transpose(out, (0, 3, 1, 2))                    # NHWC -> NCHW


# --------------------------- pure-JAX reference ------------------------------

def _conv_ref(x_nhwc, w_oihw, stride, pad):
    return jax.lax.conv_general_dilated(
        x_nhwc, jnp.transpose(w_oihw, (2, 3, 1, 0)),
        window_strides=(stride, stride),
        padding=((pad, pad), (pad, pad)),
        dimension_numbers=("NHWC", "HWIO", "NHWC"),
        precision=jax.lax.Precision.HIGHEST)


def basic_block_ref(x_nchw, params, *, in_channels, out_channels, stride,
                    drop_rate):
    del drop_rate
    x = jnp.transpose(x_nchw, (0, 2, 3, 1))
    s1 = params["bn1_gamma"] * jax.lax.rsqrt(params["bn1_var"] + BN_EPS)
    b1 = params["bn1_beta"] - params["bn1_mean"] * s1
    act1 = jnp.maximum(x * s1 + b1, 0.0)
    y = _conv_ref(act1, params["conv1_w"], stride, 1)
    s2 = params["bn2_gamma"] * jax.lax.rsqrt(params["bn2_var"] + BN_EPS)
    b2 = params["bn2_beta"] - params["bn2_mean"] * s2
    y2 = jnp.maximum(y * s2 + b2, 0.0)
    out = _conv_ref(y2, params["conv2_w"], 1, 1)
    if in_channels != out_channels:
        out = out + _conv_ref(act1, params["shortcut_w"], stride, 0)
    else:
        out = out + x
    return jnp.transpose(out, (0, 3, 1, 2))


# ------------------------------------ main -----------------------------------

def _make_params(key, cin, cout, preact):
    k1, k2, k3 = jax.random.split(key, 3)

    def lin(lo, hi, n):
        return jnp.linspace(lo, hi, n, dtype=jnp.float32)

    p = {
        "bn1_gamma": lin(0.8, 1.2, cin), "bn1_beta": lin(-0.2, 0.2, cin),
        "bn1_mean": lin(-0.1, 0.1, cin), "bn1_var": lin(0.5, 1.5, cin),
        "bn2_gamma": lin(0.9, 1.1, cout), "bn2_beta": lin(-0.1, 0.1, cout),
        "bn2_mean": lin(-0.05, 0.05, cout), "bn2_var": lin(0.8, 1.2, cout),
        "conv1_w": (9 * cin) ** -0.5
                   * jax.random.normal(k1, (cout, cin, 3, 3), jnp.float32),
        "conv2_w": (9 * cout) ** -0.5
                   * jax.random.normal(k2, (cout, cout, 3, 3), jnp.float32),
    }
    if preact:
        p["shortcut_w"] = (cin ** -0.5
                           * jax.random.normal(k3, (cout, cin, 1, 1),
                                               jnp.float32))
    return p


if __name__ == "__main__":
    key = jax.random.PRNGKey(0)
    batch = 2
    # (in_ch, out_ch, spatial, stride): covers the folded-K path (narrow) and
    # the in-kernel im2col path (wide), projection and identity shortcuts,
    # stride 1 and stride 2.
    configs = [
        (4, 8, 16, 2),     # spec shapes: narrow, projection shortcut
        (4, 4, 16, 1),     # narrow, identity shortcut
        (32, 64, 16, 2),   # wide, projection shortcut, strided taps
        (64, 64, 16, 1),   # wide, identity shortcut
    ]

    for cfg_i, (cin, cout, hw, stride) in enumerate(configs):
        key, kp, kx = jax.random.split(key, 3)
        params = _make_params(kp, cin, cout, cin != cout)
        x = jax.random.normal(kx, (batch, cin, hw, hw), jnp.float32)

        fwd = functools.partial(basic_block_forward, in_channels=cin,
                                out_channels=cout, stride=stride,
                                drop_rate=0.0)
        out = jax.block_until_ready(jax.jit(fwd)(x, params))
        ref = basic_block_ref(x, params, in_channels=cin, out_channels=cout,
                              stride=stride, drop_rate=0.0)

        assert out.shape == (batch, cout, hw // stride, hw // stride), out.shape
        max_err = float(jnp.max(jnp.abs(out - ref)))
        assert jnp.allclose(out, ref, atol=5e-2, rtol=5e-2), (
            f"config {cfg_i} ({cin}->{cout}, s{stride}) max abs err {max_err}")

    print("KERNEL_OK")
</pallas_src>

<mosaic_0001>
module attributes {stable_mosaic.version = 11 : i64} {
  func.func @_fold_conv1_kernel(%arg0: i32, %arg1: memref<64x128xbf16, #tpu.memory_space<vmem>>, %arg2: memref<128x128xbf16, #tpu.memory_space<vmem>>, %arg3: memref<128x128xbf16, #tpu.memory_space<vmem>>, %arg4: memref<1x128xf32, #tpu.memory_space<vmem>>, %arg5: memref<1x128xf32, #tpu.memory_space<vmem>>, %arg6: memref<64x128xbf16, #tpu.memory_space<vmem>>, %arg7: memref<64x128xbf16, #tpu.memory_space<vmem>>) attributes {dimension_semantics = [#tpu.dimension_semantics<parallel>], iteration_bounds = array<i64: 2>, scalar_prefetch = 0 : i64, scratch_operands = 0 : i64, tpu.core_type = #tpu.core_type<tc>, window_params = [{transform_indices = @transform_0, window_bounds = array<i64: 64, 128>}, {pipeline_mode = #tpu.pipeline_mode<synchronous>, transform_indices = @transform_1, window_bounds = array<i64: 128, 128>}, {pipeline_mode = #tpu.pipeline_mode<synchronous>, transform_indices = @transform_2, window_bounds = array<i64: 128, 128>}, {pipeline_mode = #tpu.pipeline_mode<synchronous>, transform_indices = @transform_3, window_bounds = array<i64: 1, 128>}, {pipeline_mode = #tpu.pipeline_mode<synchronous>, transform_indices = @transform_4, window_bounds = array<i64: 1, 128>}, {transform_indices = @transform_5, window_bounds = array<i64: 64, 128>}, {transform_indices = @transform_6, window_bounds = array<i64: 64, 128>}]} {
    %c0 = arith.constant 0 : index
    %c0_0 = arith.constant 0 : index
    %0 = vector.load %arg1[%c0, %c0_0] : memref<64x128xbf16, #tpu.memory_space<vmem>>, vector<64x128xbf16>
    %c0_1 = arith.constant 0 : index
    %c0_2 = arith.constant 0 : index
    %1 = vector.load %arg2[%c0_1, %c0_2] : memref<128x128xbf16, #tpu.memory_space<vmem>>, vector<128x128xbf16>
    %cst = arith.constant dense<0.000000e+00> : vector<64x128xf32>
    %2 = tpu.matmul %0, %1, %cst {dimension_numbers = #tpu.dot_dimension_numbers<[1], [0], [0], [1], [0, 0, 1, 1], [], []>} : vector<64x128xbf16>, vector<128x128xbf16>, vector<64x128xf32> -> vector<64x128xf32>
    %c0_3 = arith.constant 0 : index
    %c0_4 = arith.constant 0 : index
    %3 = vector.load %arg4[%c0_3, %c0_4] : memref<1x128xf32, #tpu.memory_space<vmem>>, vector<1x128xf32>
    %4 = vector.broadcast %3 : vector<1x128xf32> to vector<64x128xf32>
    %5 = arith.mulf %2, %4 : vector<64x128xf32>
    %c0_5 = arith.constant 0 : index
    %c0_6 = arith.constant 0 : index
    %6 = vector.load %arg5[%c0_5, %c0_6] : memref<1x128xf32, #tpu.memory_space<vmem>>, vector<1x128xf32>
    %7 = vector.broadcast %6 : vector<1x128xf32> to vector<64x128xf32>
    %8 = arith.addf %5, %7 : vector<64x128xf32>
    %cst_7 = arith.constant 0.000000e+00 : f32
    %9 = vector.broadcast %cst_7 : f32 to vector<64x128xf32>
    %10 = arith.maximumf %8, %9 : vector<64x128xf32>
    %11 = arith.truncf %10 : vector<64x128xf32> to vector<64x128xbf16>
    %c0_8 = arith.constant 0 : index
    %c0_9 = arith.constant 0 : index
    %12 = vector.load %arg6[%c0_8, %c0_9] : memref<64x128xbf16, #tpu.memory_space<vmem>>, vector<64x128xbf16>
    tpu.vector_store %arg6[%c0_8, %c0_9], %11 {strides = array<i32>} : memref<64x128xbf16, #tpu.memory_space<vmem>>, vector<64x128xbf16>,
    %c0_10 = arith.constant 0 : index
    %c0_11 = arith.constant 0 : index
    %13 = vector.load %arg3[%c0_10, %c0_11] : memref<128x128xbf16, #tpu.memory_space<vmem>>, vector<128x128xbf16>
    %cst_12 = arith.constant dense<0.000000e+00> : vector<64x128xf32>
    %14 = tpu.matmul %0, %13, %cst_12 {dimension_numbers = #tpu.dot_dimension_numbers<[1], [0], [0], [1], [0, 0, 1, 1], [], []>} : vector<64x128xbf16>, vector<128x128xbf16>, vector<64x128xf32> -> vector<64x128xf32>
    %15 = arith.truncf %14 : vector<64x128xf32> to vector<64x128xbf16>
    %c0_13 = arith.constant 0 : index
    %c0_14 = arith.constant 0 : index
    %16 = vector.load %arg7[%c0_13, %c0_14] : memref<64x128xbf16, #tpu.memory_space<vmem>>, vector<64x128xbf16>
    tpu.vector_store %arg7[%c0_13, %c0_14], %15 {strides = array<i32>} : memref<64x128xbf16, #tpu.memory_space<vmem>>, vector<64x128xbf16>,
    return
  }
  func.func @transform_0(%arg0: i32) -> (i32, i32) {
    %c0_i32 = arith.constant 0 : i32
    %c0_i32_0 = arith.constant 0 : i32
    return %arg0, %c0_i32 : i32, i32
  }
  func.func @transform_1(%arg0: i32) -> (i32, i32) {
    %c0_i32 = arith.constant 0 : i32
    %c0_i32_0 = arith.constant 0 : i32
    %c0_i32_1 = arith.constant 0 : i32
    return %c0_i32, %c0_i32_0 : i32, i32
  }
  func.func @transform_2(%arg0: i32) -> (i32, i32) {
    %c0_i32 = arith.constant 0 : i32
    %c0_i32_0 = arith.constant 0 : i32
    %c0_i32_1 = arith.constant 0 : i32
    return %c0_i32, %c0_i32_0 : i32, i32
  }
  func.func @transform_3(%arg0: i32) -> (i32, i32) {
    %c0_i32 = arith.constant 0 : i32
    %c0_i32_0 = arith.constant 0 : i32
    %c0_i32_1 = arith.constant 0 : i32
    return %c0_i32, %c0_i32_0 : i32, i32
  }
  func.func @transform_4(%arg0: i32) -> (i32, i32) {
    %c0_i32 = arith.constant 0 : i32
    %c0_i32_0 = arith.constant 0 : i32
    %c0_i32_1 = arith.constant 0 : i32
    return %c0_i32, %c0_i32_0 : i32, i32
  }
  func.func @transform_5(%arg0: i32) -> (i32, i32) {
    %c0_i32 = arith.constant 0 : i32
    %c0_i32_0 = arith.constant 0 : i32
    return %arg0, %c0_i32 : i32, i32
  }
  func.func @transform_6(%arg0: i32) -> (i32, i32) {
    %c0_i32 = arith.constant 0 : i32
    %c0_i32_0 = arith.constant 0 : i32
    return %arg0, %c0_i32 : i32, i32
  }
}

module attributes {stable_mosaic.version = 11 : i64} {
  func.func @_fold_conv2_kernel(%arg0: i32, %arg1: memref<64x128xbf16, #tpu.memory_space<vmem>>, %arg2: memref<128x128xbf16, #tpu.memory_space<vmem>>, %arg3: memref<64x128xbf16, #tpu.memory_space<vmem>>, %arg4: memref<64x128xf32, #tpu.memory_space<vmem>>) attributes {dimension_semantics = [#tpu.dimension_semantics<parallel>], iteration_bounds = array<i64: 2>, scalar_prefetch = 0 : i64, scratch_operands = 0 : i64, tpu.core_type = #tpu.core_type<tc>, window_params = [{transform_indices = @transform_0, window_bounds = array<i64: 64, 128>}, {pipeline_mode = #tpu.pipeline_mode<synchronous>, transform_indices = @transform_1, window_bounds = array<i64: 128, 128>}, {transform_indices = @transform_2, window_bounds = array<i64: 64, 128>}, {transform_indices = @transform_3, window_bounds = array<i64: 64, 128>}]} {
    %c0 = arith.constant 0 : index
    %c0_0 = arith.constant 0 : index
    %0 = vector.load %arg1[%c0, %c0_0] : memref<64x128xbf16, #tpu.memory_space<vmem>>, vector<64x128xbf16>
    %c0_1 = arith.constant 0 : index
    %c0_2 = arith.constant 0 : index
    %1 = vector.load %arg2[%c0_1, %c0_2] : memref<128x128xbf16, #tpu.memory_space<vmem>>, vector<128x128xbf16>
    %cst = arith.constant dense<0.000000e+00> : vector<64x128xf32>
    %2 = tpu.matmul %0, %1, %cst {dimension_numbers = #tpu.dot_dimension_numbers<[1], [0], [0], [1], [0, 0, 1, 1], [], []>} : vector<64x128xbf16>, vector<128x128xbf16>, vector<64x128xf32> -> vector<64x128xf32>
    %c0_3 = arith.constant 0 : index
    %c0_4 = arith.constant 0 : index
    %3 = vector.load %arg3[%c0_3, %c0_4] : memref<64x128xbf16, #tpu.memory_space<vmem>>, vector<64x128xbf16>
    %4 = arith.extf %3 : vector<64x128xbf16> to vector<64x128xf32>
    %5 = arith.addf %2, %4 : vector<64x128xf32>
    %c0_5 = arith.constant 0 : index
    %c0_6 = arith.constant 0 : index
    %6 = vector.load %arg4[%c0_5, %c0_6] : memref<64x128xf32, #tpu.memory_space<vmem>>, vector<64x128xf32>
    tpu.vector_store %arg4[%c0_5, %c0_6], %5 {strides = array<i32>} : memref<64x128xf32, #tpu.memory_space<vmem>>, vector<64x128xf32>,
    return
  }
  func.func @transform_0(%arg0: i32) -> (i32, i32) {
    %c0_i32 = arith.constant 0 : i32
    %c0_i32_0 = arith.constant 0 : i32
    return %arg0, %c0_i32 : i32, i32
  }
  func.func @transform_1(%arg0: i32) -> (i32, i32) {
    %c0_i32 = arith.constant 0 : i32
    %c0_i32_0 = arith.constant 0 : i32
    %c0_i32_1 = arith.constant 0 : i32
    return %c0_i32, %c0_i32_0 : i32, i32
  }
  func.func @transform_2(%arg0: i32) -> (i32, i32) {
    %c0_i32 = arith.constant 0 : i32
    %c0_i32_0 = arith.constant 0 : i32
    return %arg0, %c0_i32 : i32, i32
  }
  func.func @transform_3(%arg0: i32) -> (i32, i32) {
    %c0_i32 = arith.constant 0 : i32
    %c0_i32_0 = arith.constant 0 : i32
    return %arg0, %c0_i32 : i32, i32
  }
}

</mosaic_0001>

<llo_original>
// kernel: basic_block_forward.3
$region0: #{basic_block_forward.3}
  #allocation0 [shape = 'u32[]', space=smem, size = 0x4, offset = 0x4, fixed_abs, tag = 'smem constant byte address 0x4 - core index']
  #allocation1 [shape = 'u32[144,128]{1,0:T(1,128)}', space=vmem, size = 0x12000, scoped, tag = 'internal scratch']
  %s0 = inlined_call_operand.vmem [shape: bf16[128,128], index: 0, kind: input, shape index: {}]
  %s1 = inlined_call_operand.vmem [shape: bf16[128,128], index: 1, kind: input, shape index: {}]
  %s2 = inlined_call_operand.vmem [shape: bf16[128,128], index: 2, kind: input, shape index: {}]
  %s3 = inlined_call_operand.vmem [shape: f32[128,128], index: 3, kind: output, shape index: {}]
  %s4 = sld [smem:[#allocation0]]
  $region45: #{basic_block_forward.3} parent=0
    _
  %s6 = ssub.s32 1, %s4
  %s7 = scalar_select 0, %s6, %s4
  loop: start=0, step=1, limit=4
  $region2: #{basic_block_forward.3} parent=0 // loop_pre_header
    _
  $region3: #{basic_block_forward.3} parent=0 // loop_header
    %s9 = sphi 0, %s13
    %p10 = scmp.ge.s32.totalorder %s9, 4
    %s19 = sphi 0, %s21
    %s22 = sphi 0, %s19
    %s23 = sphi 0, %s22
    %s39 = sphi 0, %s23
    %s43 = sphi 0, %s43
    %s45 = sphi 0, %s43
    %s46 = sphi 0, %s45
    %s60 = sphi 0, %s46
    %s66 = sphi 0, %s68
    %s69 = sphi 0, %s66
    %s70 = sphi 0, %s69
    %s86 = sphi 0, %s70
    %s92 = sphi 0, %s94
    %s95 = sphi 0, %s92
    %s96 = sphi 0, %s95
    %s112 = sphi 0, %s96
  $region4: #{basic_block_forward.3} parent=0 // loop_header_branch
    %12 = sbr.rel (%p10) target = $region8
  $region5: #{basic_block_forward.3} parent=0 // loop_body
    %s14 = ssub.s32 %s9, 1
    %s15 = ssub.s32 %s9, 2
    %s16 = sadd.s32 %s9, 1
    %s17 = ssub.s32 %s9, %s16
    %p18 = scmp.eq.s32.totalorder %s17, 0
    %s20 = sadd.s32 %s19, 1
    %s21 = scalar_select %p18, %s19, %s20
    %p24 = pneg %p18
    %p25 = scmp.eq.s32.totalorder %s9, 1
    %p26 = por %p24, %p25
    %p27 = scmp.ne.s32.totalorder %s19, %s22
    %p28 = scmp.eq.s32.totalorder %s9, 0
    %p29 = por %p27, %p28
    %p30 = scmp.ne.s32.totalorder %s19, %s22
    %p31 = scmp.eq.s32.totalorder %s14, 1
    %p32 = por %p30, %p31
    %p33 = scmp.ne.s32.totalorder %s22, %s23
    %p34 = scmp.eq.s32.totalorder %s14, 0
    %p35 = por %p33, %p34
    %p36 = scmp.ne.s32.totalorder %s22, %s23
    %p37 = scmp.eq.s32.totalorder %s15, 1
    %p38 = por %p36, %p37
    %p40 = scmp.ne.s32.totalorder %s23, %s39
    %p41 = scmp.eq.s32.totalorder %s15, 0
    %p42 = por %p40, %p41
    %s44 = sadd.s32 %s43, 1
    %p47 = scmp.eq.s32.totalorder %s9, 1
    %p48 = scmp.ne.s32.totalorder %s43, %s45
    %p49 = scmp.eq.s32.totalorder %s9, 0
    %p50 = por %p48, %p49
    %p51 = scmp.ne.s32.totalorder %s43, %s45
    %p52 = scmp.eq.s32.totalorder %s14, 1
    %p53 = por %p51, %p52
    %p54 = scmp.ne.s32.totalorder %s45, %s46
    %p55 = scmp.eq.s32.totalorder %s14, 0
    %p56 = por %p54, %p55
    %p57 = scmp.ne.s32.totalorder %s45, %s46
    %p58 = scmp.eq.s32.totalorder %s15, 1
    %p59 = por %p57, %p58
    %p61 = scmp.ne.s32.totalorder %s46, %s60
    %p62 = scmp.eq.s32.totalorder %s15, 0
    %p63 = por %p61, %p62
    %s64 = ssub.s32 %s9, %s16
    %p65 = scmp.eq.s32.totalorder %s64, 0
    %s67 = sadd.s32 %s66, 1
    %s68 = scalar_select %p65, %s66, %s67
    %p71 = pneg %p65
    %p72 = scmp.eq.s32.totalorder %s9, 1
    %p73 = por %p71, %p72
    %p74 = scmp.ne.s32.totalorder %s66, %s69
    %p75 = scmp.eq.s32.totalorder %s9, 0
    %p76 = por %p74, %p75
    %p77 = scmp.ne.s32.totalorder %s66, %s69
    %p78 = scmp.eq.s32.totalorder %s14, 1
    %p79 = por %p77, %p78
    %p80 = scmp.ne.s32.totalorder %s69, %s70
    %p81 = scmp.eq.s32.totalorder %s14, 0
    %p82 = por %p80, %p81
    %p83 = scmp.ne.s32.totalorder %s69, %s70
    %p84 = scmp.eq.s32.totalorder %s15, 1
    %p85 = por %p83, %p84
    %p87 = scmp.ne.s32.totalorder %s70, %s86
    %p88 = scmp.eq.s32.totalorder %s15, 0
    %p89 = por %p87, %p88
    %s90 = ssub.s32 %s9, %s16
    %p91 = scmp.eq.s32.totalorder %s90, 0
    %s93 = sadd.s32 %s92, 1
    %s94 = scalar_select %p91, %s92, %s93
    %p97 = pneg %p91
    %p98 = scmp.eq.s32.totalorder %s9, 1
    %p99 = por %p97, %p98
    %p100 = scmp.ne.s32.totalorder %s92, %s95
    %p101 = scmp.eq.s32.totalorder %s9, 0
    %p102 = por %p100, %p101
    %p103 = scmp.ne.s32.totalorder %s92, %s95
    %p104 = scmp.eq.s32.totalorder %s14, 1
    %p105 = por %p103, %p104
    %p106 = scmp.ne.s32.totalorder %s95, %s96
    %p107 = scmp.eq.s32.totalorder %s14, 0
    %p108 = por %p106, %p107
    %p109 = scmp.ne.s32.totalorder %s95, %s96
    %p110 = scmp.eq.s32.totalorder %s15, 1
    %p111 = por %p109, %p110
    %p113 = scmp.ne.s32.totalorder %s96, %s112
    %p114 = scmp.eq.s32.totalorder %s15, 0
    %p115 = por %p113, %p114
    %p116 = scmp.le.s32.totalorder 1, %s9
    %p117 = scmp.lt.s32.totalorder %s9, 3
    %p118 = pnand %p116, %p117
    %p119 = pneg %p118
    // Predicated region
    $region9: #{basic_block_forward.3} parent=5 // pred_check
      _
    $region10: #{basic_block_forward.3} parent=5 // pred_check_branch
      %121 = sbr.rel (%p118) target = $region12
    $region11: #{basic_block_forward.3} parent=5 // pred_region
      %s122 = ssub.s32 %s9, 1
      // Predicated region
      $region13: #{basic_block_forward.3} parent=11 // pred_check
        %p123 = pneg %p56
      $region14: #{basic_block_forward.3} parent=11 // pred_check_branch
        %125 = sbr.rel (%p123) target = $region16
      $region15: #{basic_block_forward.3} parent=11 // pred_region
        _
      $region16: #{basic_block_forward.3} parent=11 // pred_fallthru
        _
    $region12: #{basic_block_forward.3} parent=5 // pred_fallthru
      _
    %p126 = scmp.lt.s32.totalorder %s9, 2
    // Predicated region
    $region17: #{basic_block_forward.3} parent=5 // pred_check
      %p127 = pneg %p126
    $region18: #{basic_block_forward.3} parent=5 // pred_check_branch
      %129 = sbr.rel (%p127) target = $region20
    $region19: #{basic_block_forward.3} parent=5 // pred_region
      // Predicated region
      $region21: #{basic_block_forward.3} parent=19 // pred_check
        %p130 = pneg %p29
      $region22: #{basic_block_forward.3} parent=19 // pred_check_branch
        %132 = sbr.rel (%p130) target = $region24
      $region23: #{basic_block_forward.3} parent=19 // pred_region
        %s133 = smul.u32 8, %s9
        %p134 = scmp.lt.s32.totalorder %s133, 15
        %s135 = scalar_select %p134, %s133, 15
        %s136 = smul.addr %s135, 4
        %s137 = scalar_lea.vmem %s0, %s136
        %s138 = smul.u32 8, %s9
      $region24: #{basic_block_forward.3} parent=19 // pred_fallthru
        _
      // Predicated region
      $region25: #{basic_block_forward.3} parent=19 // pred_check
        %p139 = pneg %p76
      $region26: #{basic_block_forward.3} parent=19 // pred_check_branch
        %141 = sbr.rel (%p139) target = $region28
      $region27: #{basic_block_forward.3} parent=19 // pred_region
        %s142 = smul.u32 8, %s9
        %p143 = scmp.lt.s32.totalorder %s142, 15
        %s144 = scalar_select %p143, %s142, 15
        %s145 = smul.addr %s144, 4
        %s146 = scalar_lea.vmem %s2, %s145
        %s147 = smul.u32 8, %s9
      $region28: #{basic_block_forward.3} parent=19 // pred_fallthru
        _
    $region20: #{basic_block_forward.3} parent=5 // pred_fallthru
      _
    %p148 = scmp.le.s32.totalorder 1, %s9
    %p149 = scmp.lt.s32.totalorder %s9, 3
    %p150 = pnand %p148, %p149
    %p151 = pneg %p150
    // Predicated region
    $region29: #{basic_block_forward.3} parent=5 // pred_check
      _
    $region30: #{basic_block_forward.3} parent=5 // pred_check_branch
      %153 = sbr.rel (%p150) target = $region32
    $region31: #{basic_block_forward.3} parent=5 // pred_region
      %s154 = ssub.s32 %s9, 1
      %s155 = smul.u32 8, %s14
      %p156 = scmp.lt.s32.totalorder %s155, 15
      %s157 = scalar_select %p156, %s155, 15
      %s158 = smul.addr %s157, 4
      %s159 = scalar_lea.vmem %s0, %s158
      %p160 = pneg %p35
      %p161 = pneg %p32
      %p162 = pneg %p56
      %p163 = pneg %p53
      %s164 = smul.u32 8, %s14
      %p165 = scmp.lt.s32.totalorder %s164, 15
      %s166 = scalar_select %p165, %s164, 15
      %s167 = smul.addr %s166, 4
      %s168 = scalar_lea.vmem %s2, %s167
      %p169 = pneg %p82
      %p170 = pneg %p79
      %p171 = pneg %p108
      %p172 = pneg %p105
      %s173 = smul.u32 8, %s14
      %p174 = scmp.lt.s32.totalorder %s173, 15
      %s175 = scalar_select %p174, %s173, 15
      %s176 = smul.addr %s175, 8
      %s177 = scalar_lea.vmem %s3, %s176
      %s178 = smul.u32 8, %s14
      %p179 = scmp.lt.s32.totalorder %s178, 15
      %s180 = scalar_select %p179, %s178, 15
      %s181 = smul.addr %s180, 4
      %s182 = scalar_lea.vmem %s0, %s181
      %s183 = smul.u32 8, %s14
      %s184 = smul.u32 8, %s14
      %p185 = scmp.lt.s32.totalorder %s184, 15
      %s186 = scalar_select %p185, %s184, 15
      %s187 = smul.addr %s186, 4
      %s188 = scalar_lea.vmem %s2, %s187
      %s189 = smul.u32 8, %s14
      %s190 = smul.u32 8, %s14
      %p191 = scmp.lt.s32.totalorder %s190, 15
      %s192 = scalar_select %p191, %s190, 15
      %s193 = smul.addr %s192, 8
      %s194 = scalar_lea.vmem %s3, %s193
      %s195 = smul.u32 8, %s14
      %v197 = vld [vmem:[%s182] sm:$0xf]
      %v198 = vld [vmem:[%s182 + $0x4] sm:$0xf]
      %v199 = vld [vmem:[%s182 + $0x8] sm:$0xf]
      %v200 = vld [vmem:[%s182 + $0xc] sm:$0xf]
      %v201 = vld [vmem:[%s182 + $0x10] sm:$0xf]
      %v202 = vld [vmem:[%s182 + $0x14] sm:$0xf]
      %v203 = vld [vmem:[%s182 + $0x18] sm:$0xf]
      %v204 = vld [vmem:[%s182 + $0x1c] sm:$0xf]
      %v205 = vld [vmem:[%s1] sm:$0xf]
      %v206 = vld [vmem:[%s1 + $0x4] sm:$0xf]
      %v207 = vld [vmem:[%s1 + $0x8] sm:$0xf]
      %v208 = vld [vmem:[%s1 + $0xc] sm:$0xf]
      %v209 = vld [vmem:[%s1 + $0x10] sm:$0xf]
      %v210 = vld [vmem:[%s1 + $0x14] sm:$0xf]
      %v211 = vld [vmem:[%s1 + $0x18] sm:$0xf]
      %v212 = vld [vmem:[%s1 + $0x1c] sm:$0xf]
      %v213 = vld [vmem:[%s1 + $0x20] sm:$0xf]
      %v214 = vld [vmem:[%s1 + $0x24] sm:$0xf]
      %v215 = vld [vmem:[%s1 + $0x28] sm:$0xf]
      %v216 = vld [vmem:[%s1 + $0x2c] sm:$0xf]
      %v217 = vld [vmem:[%s1 + $0x30] sm:$0xf]
      %v218 = vld [vmem:[%s1 + $0x34] sm:$0xf]
      %v219 = vld [vmem:[%s1 + $0x38] sm:$0xf]
      %v220 = vld [vmem:[%s1 + $0x3c] sm:$0xf]
      %v221 = vld [vmem:[%s188] sm:$0xf]
      %v222 = vld [vmem:[%s188 + $0x4] sm:$0xf]
      %v223 = vld [vmem:[%s188 + $0x8] sm:$0xf]
      %v224 = vld [vmem:[%s188 + $0xc] sm:$0xf]
      %v225 = vld [vmem:[%s188 + $0x10] sm:$0xf]
      %v226 = vld [vmem:[%s188 + $0x14] sm:$0xf]
      %v227 = vld [vmem:[%s188 + $0x18] sm:$0xf]
      %v228 = vld [vmem:[%s188 + $0x1c] sm:$0xf]
      %v229 = vunpack.c.l.bf16 %v221
      %v230 = vunpack.c.l.bf16 %v222
      %v231 = vunpack.c.l.bf16 %v223
      %v232 = vunpack.c.l.bf16 %v224
      %v233 = vunpack.c.l.bf16 %v225
      %v234 = vunpack.c.l.bf16 %v226
      %v235 = vunpack.c.l.bf16 %v227
      %v236 = vunpack.c.l.bf16 %v228
      %v245 = vunpack.c.l.b16 %v197
      %v246 = vunpack.c.l.b16 %v198
      %v247 = vunpack.c.l.b16 %v199
      %v248 = vunpack.c.l.b16 %v200
      %v249 = vunpack.c.l.b16 %v201
      %v250 = vunpack.c.l.b16 %v202
      %v251 = vunpack.c.l.b16 %v203
      %v252 = vunpack.c.l.b16 %v204
      %v253 = vpack.c.b16 %v246, %v245
      %v254 = vpack.c.b16 %v248, %v247
      %v255 = vpack.c.b16 %v250, %v249
      %v256 = vpack.c.b16 %v252, %v251
      %v277 = vunpack.c.l.b16 %v205
      %v278 = vunpack.c.l.b16 %v206
      %v279 = vunpack.c.l.b16 %v207
      %v280 = vunpack.c.l.b16 %v208
      %v281 = vunpack.c.l.b16 %v209
      %v282 = vunpack.c.l.b16 %v210
      %v283 = vunpack.c.l.b16 %v211
      %v284 = vunpack.c.l.b16 %v212
      %v285 = vunpack.c.l.b16 %v213
      %v286 = vunpack.c.l.b16 %v214
      %v287 = vunpack.c.l.b16 %v215
      %v288 = vunpack.c.l.b16 %v216
      %v289 = vunpack.c.l.b16 %v217
      %v290 = vunpack.c.l.b16 %v218
      %v291 = vunpack.c.l.b16 %v219
      %v292 = vunpack.c.l.b16 %v220
      %v293 = vpack.c.b16 %v278, %v277
      %v294 = vpack.c.b16 %v280, %v279
      %v295 = vpack.c.b16 %v282, %v281
      %v296 = vpack.c.b16 %v284, %v283
      %v297 = vpack.c.b16 %v286, %v285
      %v298 = vpack.c.b16 %v288, %v287
      %v299 = vpack.c.b16 %v290, %v289
      %v300 = vpack.c.b16 %v292, %v291
      %309 = vmatprep.subr.bf16.mxu0 0
      %310 = vmatpush1.bf16.msra.mxu0 %v300
      %311 = vmatprep.subr.bf16.mxu0 0
      %312 = vmatpush1.bf16.msra.mxu0 %v299
      %313 = vmatprep.subr.bf16.mxu0 0
      %314 = vmatpush1.bf16.msra.mxu0 %v298
      %315 = vmatprep.subr.bf16.mxu0 0
      %316 = vmatpush1.bf16.msra.mxu0 %v297
      %317 = vmatprep.subr.bf16.mxu0 0
      %318 = vmatpush1.bf16.msra.mxu0 %v296
      %319 = vmatprep.subr.bf16.mxu0 0
      %320 = vmatpush1.bf16.msra.mxu0 %v295
      %321 = vmatprep.subr.bf16.mxu0 0
      %322 = vmatpush1.bf16.msra.mxu0 %v294
      %323 = vmatprep.subr.bf16.mxu0 0
      %324 = vmatpush1.bf16.msra.mxu0 %v293
      %325 = vmatprep.subr.bf16.mxu0 0
      %326 = vmatpush2.bf16.msra.mxu0 0
      %327 = vmatprep.subr.bf16.mxu0 0
      %328 = vmatpush2.bf16.msra.mxu0 0
      %329 = vmatprep.subr.bf16.mxu0 0
      %330 = vmatpush2.bf16.msra.mxu0 0
      %331 = vmatprep.subr.bf16.mxu0 0
      %332 = vmatpush2.bf16.msra.mxu0 0
      %333 = vmatprep.subr.bf16.mxu0 0
      %334 = vmatpush2.bf16.msra.mxu0 0
      %335 = vmatprep.subr.bf16.mxu0 0
      %336 = vmatpush2.bf16.msra.mxu0 0
      %337 = vmatprep.subr.bf16.mxu0 0
      %338 = vmatpush2.bf16.msra.mxu0 0
      %339 = vmatprep.subr.bf16.mxu0 0
      %340 = vmatpush2.bf16.msra.mxu0 0
      %341 = vmatprep.mubr.bf16.mxu0 0
      %342 = vmatmul.mubr.bf16.gmra.mxu0 %v253
      %v343 = vpop.f32.mrf.mxu0
      %v344 = vadd.f32 %v229, %v343
      %v345 = vpop.f32.mrf.mxu0
      %v346 = vpop.f32.mrf.mxu0
      %v347 = vadd.f32 %v230, %v346
      %v348 = vpop.f32.mrf.mxu0
      %349 = vmatprep.mubr.bf16.mxu0 0
      %350 = vmatmul.mubr.bf16.gmra.mxu0 %v254
      %v351 = vpop.f32.mrf.mxu0
      %v352 = vadd.f32 %v231, %v351
      %v353 = vpop.f32.mrf.mxu0
      %v354 = vpop.f32.mrf.mxu0
      %v355 = vadd.f32 %v232, %v354
      %v356 = vpop.f32.mrf.mxu0
      %357 = vmatprep.mubr.bf16.mxu0 0
      %358 = vmatmul.mubr.bf16.gmra.mxu0 %v255
      %v359 = vpop.f32.mrf.mxu0
      %v360 = vadd.f32 %v233, %v359
      %v361 = vpop.f32.mrf.mxu0
      %v362 = vpop.f32.mrf.mxu0
      %v363 = vadd.f32 %v234, %v362
      %v364 = vpop.f32.mrf.mxu0
      %365 = vmatprep.mubr.bf16.mxu0 0
      %366 = vmatmul.mubr.bf16.gmra.mxu0 %v256
      %v367 = vpop.f32.mrf.mxu0
      %v368 = vadd.f32 %v235, %v367
      %v369 = vpop.f32.mrf.mxu0
      %v370 = vpop.f32.mrf.mxu0
      %v371 = vadd.f32 %v236, %v370
      %v372 = vpop.f32.mrf.mxu0
      %373 = vdwg.mxu0
      %374 = vst [vmem:[%s194] sm:$0xff] %v344
      %375 = vst [vmem:[%s194 + $0x8] sm:$0xff] %v347
      %376 = vst [vmem:[%s194 + $0x10] sm:$0xff] %v352
      %377 = vst [vmem:[%s194 + $0x18] sm:$0xff] %v355
      %378 = vst [vmem:[%s194 + $0x20] sm:$0xff] %v360
      %379 = vst [vmem:[%s194 + $0x28] sm:$0xff] %v363
      %380 = vst [vmem:[%s194 + $0x30] sm:$0xff] %v368
      %381 = vst [vmem:[%s194 + $0x38] sm:$0xff] %v371
      %s382 = smul.u32 8, %s14
      %p383 = scmp.lt.s32.totalorder %s382, 15
      %s384 = scalar_select %p383, %s382, 15
      %s385 = smul.addr %s384, 8
      %s386 = scalar_lea.vmem %s3, %s385
      // Predicated region
      $region33: #{basic_block_forward.3} parent=31 // pred_check
        %p387 = pneg %p105
      $region34: #{basic_block_forward.3} parent=31 // pred_check_branch
        %389 = sbr.rel (%p387) target = $region36
      $region35: #{basic_block_forward.3} parent=31 // pred_region
        %s390 = smul.u32 8, %s14
      $region36: #{basic_block_forward.3} parent=31 // pred_fallthru
        _
    $region32: #{basic_block_forward.3} parent=5 // pred_fallthru
      _
    %p391 = scmp.le.s32.totalorder 2, %s9
    // Predicated region
    $region37: #{basic_block_forward.3} parent=5 // pred_check
      %p392 = pneg %p391
    $region38: #{basic_block_forward.3} parent=5 // pred_check_branch
      %394 = sbr.rel (%p392) target = $region40
    $region39: #{basic_block_forward.3} parent=5 // pred_region
      %s395 = ssub.s32 %s9, 2
      // Predicated region
      $region41: #{basic_block_forward.3} parent=39 // pred_check
        %p396 = pneg %p111
      $region42: #{basic_block_forward.3} parent=39 // pred_check_branch
        %398 = sbr.rel (%p396) target = $region44
      $region43: #{basic_block_forward.3} parent=39 // pred_region
        %s399 = smul.u32 8, %s15
        %p400 = scmp.lt.s32.totalorder %s399, 15
        %s401 = scalar_select %p400, %s399, 15
        %s402 = smul.addr %s401, 8
        %s403 = scalar_lea.vmem %s3, %s402
      $region44: #{basic_block_forward.3} parent=39 // pred_fallthru
        _
    $region40: #{basic_block_forward.3} parent=5 // pred_fallthru
      _
  $region6: #{basic_block_forward.3} parent=0 // loop_footer
    %s13 = sadd.s32 1, %s9
  $region7: #{basic_block_forward.3} parent=0 // loop_footer_branch
    %8 = sbr.rel target = $region3
  $region8: #{basic_block_forward.3} parent=0 // loop_exit
    _

// kernel: basic_block_forward.2
$region0: #{basic_block_forward.2}
  #allocation0 [shape = 'u32[]', space=smem, size = 0x4, offset = 0x4, fixed_abs, tag = 'smem constant byte address 0x4 - core index']
  #allocation1 [shape = 'u32[144,128]{1,0:T(1,128)}', space=vmem, size = 0x12000, scoped, tag = 'internal scratch']
  %s0 = inlined_call_operand.vmem [shape: bf16[128,128], index: 0, kind: input, shape index: {}]
  %s1 = inlined_call_operand.vmem [shape: bf16[128,128], index: 1, kind: input, shape index: {}]
  %s2 = inlined_call_operand.vmem [shape: bf16[128,128], index: 2, kind: input, shape index: {}]
  %s3 = inlined_call_operand.vmem [shape: f32[1,128], index: 3, kind: input, shape index: {}]
  %s4 = inlined_call_operand.vmem [shape: f32[1,128], index: 4, kind: input, shape index: {}]
  %s5 = inlined_call_operand.vmem [shape: bf16[128,128], index: 5, kind: output, shape index: {0}]
  %s6 = inlined_call_operand.vmem [shape: bf16[128,128], index: 6, kind: output, shape index: {1}]
  %7 = xla_tuple %s5, %s6
  %s8 = sld [smem:[#allocation0]]
  $region61: #{basic_block_forward.2} parent=0
    _
  %s10 = ssub.s32 1, %s8
  %s11 = scalar_select 0, %s10, %s8
  loop: start=0, step=1, limit=4
  $region2: #{basic_block_forward.2} parent=0 // loop_pre_header
    _
  $region3: #{basic_block_forward.2} parent=0 // loop_header
    %s13 = sphi 0, %s17
    %p14 = scmp.ge.s32.totalorder %s13, 4
    %s23 = sphi 0, %s25
    %s26 = sphi 0, %s23
    %s27 = sphi 0, %s26
    %s43 = sphi 0, %s27
    %s47 = sphi 0, %s47
    %s49 = sphi 0, %s47
    %s50 = sphi 0, %s49
    %s64 = sphi 0, %s50
    %s68 = sphi 0, %s68
    %s70 = sphi 0, %s68
    %s71 = sphi 0, %s70
    %s85 = sphi 0, %s71
    %s89 = sphi 0, %s89
    %s91 = sphi 0, %s89
    %s92 = sphi 0, %s91
    %s106 = sphi 0, %s92
    %s110 = sphi 0, %s110
    %s112 = sphi 0, %s110
    %s113 = sphi 0, %s112
    %s127 = sphi 0, %s113
    %s133 = sphi 0, %s135
    %s136 = sphi 0, %s133
    %s137 = sphi 0, %s136
    %s153 = sphi 0, %s137
    %s159 = sphi 0, %s161
    %s162 = sphi 0, %s159
    %s163 = sphi 0, %s162
    %s179 = sphi 0, %s163
  $region4: #{basic_block_forward.2} parent=0 // loop_header_branch
    %16 = sbr.rel (%p14) target = $region8
  $region5: #{basic_block_forward.2} parent=0 // loop_body
    %s18 = ssub.s32 %s13, 1
    %s19 = ssub.s32 %s13, 2
    %s20 = sadd.s32 %s13, 1
    %s21 = ssub.s32 %s13, %s20
    %p22 = scmp.eq.s32.totalorder %s21, 0
    %s24 = sadd.s32 %s23, 1
    %s25 = scalar_select %p22, %s23, %s24
    %p28 = pneg %p22
    %p29 = scmp.eq.s32.totalorder %s13, 1
    %p30 = por %p28, %p29
    %p31 = scmp.ne.s32.totalorder %s23, %s26
    %p32 = scmp.eq.s32.totalorder %s13, 0
    %p33 = por %p31, %p32
    %p34 = scmp.ne.s32.totalorder %s23, %s26
    %p35 = scmp.eq.s32.totalorder %s18, 1
    %p36 = por %p34, %p35
    %p37 = scmp.ne.s32.totalorder %s26, %s27
    %p38 = scmp.eq.s32.totalorder %s18, 0
    %p39 = por %p37, %p38
    %p40 = scmp.ne.s32.totalorder %s26, %s27
    %p41 = scmp.eq.s32.totalorder %s19, 1
    %p42 = por %p40, %p41
    %p44 = scmp.ne.s32.totalorder %s27, %s43
    %p45 = scmp.eq.s32.totalorder %s19, 0
    %p46 = por %p44, %p45
    %s48 = sadd.s32 %s47, 1
    %p51 = scmp.eq.s32.totalorder %s13, 1
    %p52 = scmp.ne.s32.totalorder %s47, %s49
    %p53 = scmp.eq.s32.totalorder %s13, 0
    %p54 = por %p52, %p53
    %p55 = scmp.ne.s32.totalorder %s47, %s49
    %p56 = scmp.eq.s32.totalorder %s18, 1
    %p57 = por %p55, %p56
    %p58 = scmp.ne.s32.totalorder %s49, %s50
    %p59 = scmp.eq.s32.totalorder %s18, 0
    %p60 = por %p58, %p59
    %p61 = scmp.ne.s32.totalorder %s49, %s50
    %p62 = scmp.eq.s32.totalorder %s19, 1
    %p63 = por %p61, %p62
    %p65 = scmp.ne.s32.totalorder %s50, %s64
    %p66 = scmp.eq.s32.totalorder %s19, 0
    %p67 = por %p65, %p66
    %s69 = sadd.s32 %s68, 1
    %p72 = scmp.eq.s32.totalorder %s13, 1
    %p73 = scmp.ne.s32.totalorder %s68, %s70
    %p74 = scmp.eq.s32.totalorder %s13, 0
    %p75 = por %p73, %p74
    %p76 = scmp.ne.s32.totalorder %s68, %s70
    %p77 = scmp.eq.s32.totalorder %s18, 1
    %p78 = por %p76, %p77
    %p79 = scmp.ne.s32.totalorder %s70, %s71
    %p80 = scmp.eq.s32.totalorder %s18, 0
    %p81 = por %p79, %p80
    %p82 = scmp.ne.s32.totalorder %s70, %s71
    %p83 = scmp.eq.s32.totalorder %s19, 1
    %p84 = por %p82, %p83
    %p86 = scmp.ne.s32.totalorder %s71, %s85
    %p87 = scmp.eq.s32.totalorder %s19, 0
    %p88 = por %p86, %p87
    %s90 = sadd.s32 %s89, 1
    %p93 = scmp.eq.s32.totalorder %s13, 1
    %p94 = scmp.ne.s32.totalorder %s89, %s91
    %p95 = scmp.eq.s32.totalorder %s13, 0
    %p96 = por %p94, %p95
    %p97 = scmp.ne.s32.totalorder %s89, %s91
    %p98 = scmp.eq.s32.totalorder %s18, 1
    %p99 = por %p97, %p98
    %p100 = scmp.ne.s32.totalorder %s91, %s92
    %p101 = scmp.eq.s32.totalorder %s18, 0
    %p102 = por %p100, %p101
    %p103 = scmp.ne.s32.totalorder %s91, %s92
    %p104 = scmp.eq.s32.totalorder %s19, 1
    %p105 = por %p103, %p104
    %p107 = scmp.ne.s32.totalorder %s92, %s106
    %p108 = scmp.eq.s32.totalorder %s19, 0
    %p109 = por %p107, %p108
    %s111 = sadd.s32 %s110, 1
    %p114 = scmp.eq.s32.totalorder %s13, 1
    %p115 = scmp.ne.s32.totalorder %s110, %s112
    %p116 = scmp.eq.s32.totalorder %s13, 0
    %p117 = por %p115, %p116
    %p118 = scmp.ne.s32.totalorder %s110, %s112
    %p119 = scmp.eq.s32.totalorder %s18, 1
    %p120 = por %p118, %p119
    %p121 = scmp.ne.s32.totalorder %s112, %s113
    %p122 = scmp.eq.s32.totalorder %s18, 0
    %p123 = por %p121, %p122
    %p124 = scmp.ne.s32.totalorder %s112, %s113
    %p125 = scmp.eq.s32.totalorder %s19, 1
    %p126 = por %p124, %p125
    %p128 = scmp.ne.s32.totalorder %s113, %s127
    %p129 = scmp.eq.s32.totalorder %s19, 0
    %p130 = por %p128, %p129
    %s131 = ssub.s32 %s13, %s20
    %p132 = scmp.eq.s32.totalorder %s131, 0
    %s134 = sadd.s32 %s133, 1
    %s135 = scalar_select %p132, %s133, %s134
    %p138 = pneg %p132
    %p139 = scmp.eq.s32.totalorder %s13, 1
    %p140 = por %p138, %p139
    %p141 = scmp.ne.s32.totalorder %s133, %s136
    %p142 = scmp.eq.s32.totalorder %s13, 0
    %p143 = por %p141, %p142
    %p144 = scmp.ne.s32.totalorder %s133, %s136
    %p145 = scmp.eq.s32.totalorder %s18, 1
    %p146 = por %p144, %p145
    %p147 = scmp.ne.s32.totalorder %s136, %s137
    %p148 = scmp.eq.s32.totalorder %s18, 0
    %p149 = por %p147, %p148
    %p150 = scmp.ne.s32.totalorder %s136, %s137
    %p151 = scmp.eq.s32.totalorder %s19, 1
    %p152 = por %p150, %p151
    %p154 = scmp.ne.s32.totalorder %s137, %s153
    %p155 = scmp.eq.s32.totalorder %s19, 0
    %p156 = por %p154, %p155
    %s157 = ssub.s32 %s13, %s20
    %p158 = scmp.eq.s32.totalorder %s157, 0
    %s160 = sadd.s32 %s159, 1
    %s161 = scalar_select %p158, %s159, %s160
    %p164 = pneg %p158
    %p165 = scmp.eq.s32.totalorder %s13, 1
    %p166 = por %p164, %p165
    %p167 = scmp.ne.s32.totalorder %s159, %s162
    %p168 = scmp.eq.s32.totalorder %s13, 0
    %p169 = por %p167, %p168
    %p170 = scmp.ne.s32.totalorder %s159, %s162
    %p171 = scmp.eq.s32.totalorder %s18, 1
    %p172 = por %p170, %p171
    %p173 = scmp.ne.s32.totalorder %s162, %s163
    %p174 = scmp.eq.s32.totalorder %s18, 0
    %p175 = por %p173, %p174
    %p176 = scmp.ne.s32.totalorder %s162, %s163
    %p177 = scmp.eq.s32.totalorder %s19, 1
    %p178 = por %p176, %p177
    %p180 = scmp.ne.s32.totalorder %s163, %s179
    %p181 = scmp.eq.s32.totalorder %s19, 0
    %p182 = por %p180, %p181
    %p183 = scmp.le.s32.totalorder 1, %s13
    %p184 = scmp.lt.s32.totalorder %s13, 3
    %p185 = pnand %p183, %p184
    %p186 = pneg %p185
    // Predicated region
    $region9: #{basic_block_forward.2} parent=5 // pred_check
      _
    $region10: #{basic_block_forward.2} parent=5 // pred_check_branch
      %188 = sbr.rel (%p185) target = $region12
    $region11: #{basic_block_forward.2} parent=5 // pred_region
      %s189 = ssub.s32 %s13, 1
      // Predicated region
      $region13: #{basic_block_forward.2} parent=11 // pred_check
        %p190 = pneg %p60
      $region14: #{basic_block_forward.2} parent=11 // pred_check_branch
        %192 = sbr.rel (%p190) target = $region16
      $region15: #{basic_block_forward.2} parent=11 // pred_region
        _
      $region16: #{basic_block_forward.2} parent=11 // pred_fallthru
        _
      // Predicated region
      $region17: #{basic_block_forward.2} parent=11 // pred_check
        %p193 = pneg %p81
      $region18: #{basic_block_forward.2} parent=11 // pred_check_branch
        %195 = sbr.rel (%p193) target = $region20
      $region19: #{basic_block_forward.2} parent=11 // pred_region
        _
      $region20: #{basic_block_forward.2} parent=11 // pred_fallthru
        _
      // Predicated region
      $region21: #{basic_block_forward.2} parent=11 // pred_check
        %p196 = pneg %p102
      $region22: #{basic_block_forward.2} parent=11 // pred_check_branch
        %198 = sbr.rel (%p196) target = $region24
      $region23: #{basic_block_forward.2} parent=11 // pred_region
        _
      $region24: #{basic_block_forward.2} parent=11 // pred_fallthru
        _
      // Predicated region
      $region25: #{basic_block_forward.2} parent=11 // pred_check
        %p199 = pneg %p123
      $region26: #{basic_block_forward.2} parent=11 // pred_check_branch
        %201 = sbr.rel (%p199) target = $region28
      $region27: #{basic_block_forward.2} parent=11 // pred_region
        _
      $region28: #{basic_block_forward.2} parent=11 // pred_fallthru
        _
    $region12: #{basic_block_forward.2} parent=5 // pred_fallthru
      _
    %p202 = scmp.lt.s32.totalorder %s13, 2
    // Predicated region
    $region29: #{basic_block_forward.2} parent=5 // pred_check
      %p203 = pneg %p202
    $region30: #{basic_block_forward.2} parent=5 // pred_check_branch
      %205 = sbr.rel (%p203) target = $region32
    $region31: #{basic_block_forward.2} parent=5 // pred_region
      // Predicated region
      $region33: #{basic_block_forward.2} parent=31 // pred_check
        %p206 = pneg %p33
      $region34: #{basic_block_forward.2} parent=31 // pred_check_branch
        %208 = sbr.rel (%p206) target = $region36
      $region35: #{basic_block_forward.2} parent=31 // pred_region
        %s209 = smul.u32 8, %s13
        %p210 = scmp.lt.s32.totalorder %s209, 15
        %s211 = scalar_select %p210, %s209, 15
        %s212 = smul.addr %s211, 4
        %s213 = scalar_lea.vmem %s0, %s212
        %s214 = smul.u32 8, %s13
      $region36: #{basic_block_forward.2} parent=31 // pred_fallthru
        _
    $region32: #{basic_block_forward.2} parent=5 // pred_fallthru
      _
    %p215 = scmp.le.s32.totalorder 1, %s13
    %p216 = scmp.lt.s32.totalorder %s13, 3
    %p217 = pnand %p215, %p216
    %p218 = pneg %p217
    // Predicated region
    $region37: #{basic_block_forward.2} parent=5 // pred_check
      _
    $region38: #{basic_block_forward.2} parent=5 // pred_check_branch
      %220 = sbr.rel (%p217) target = $region40
    $region39: #{basic_block_forward.2} parent=5 // pred_region
      %s221 = ssub.s32 %s13, 1
      %s222 = smul.u32 8, %s18
      %p223 = scmp.lt.s32.totalorder %s222, 15
      %s224 = scalar_select %p223, %s222, 15
      %s225 = smul.addr %s224, 4
      %s226 = scalar_lea.vmem %s0, %s225
      %p227 = pneg %p39
      %p228 = pneg %p36
      %p229 = pneg %p60
      %p230 = pneg %p57
      %p231 = pneg %p81
      %p232 = pneg %p78
      %p233 = pneg %p102
      %p234 = pneg %p99
      %p235 = pneg %p123
      %p236 = pneg %p120
      %p237 = pneg %p149
      %p238 = pneg %p146
      %s239 = smul.u32 8, %s18
      %p240 = scmp.lt.s32.totalorder %s239, 15
      %s241 = scalar_select %p240, %s239, 15
      %s242 = smul.addr %s241, 4
      %s243 = scalar_lea.vmem %s5, %s242
      %p244 = pneg %p175
      %p245 = pneg %p172
      %s246 = smul.u32 8, %s18
      %p247 = scmp.lt.s32.totalorder %s246, 15
      %s248 = scalar_select %p247, %s246, 15
      %s249 = smul.addr %s248, 4
      %s250 = scalar_lea.vmem %s6, %s249
      %s251 = smul.u32 8, %s18
      %p252 = scmp.lt.s32.totalorder %s251, 15
      %s253 = scalar_select %p252, %s251, 15
      %s254 = smul.addr %s253, 4
      %s255 = scalar_lea.vmem %s0, %s254
      %s256 = smul.u32 8, %s18
      %s257 = smul.u32 8, %s18
      %p258 = scmp.lt.s32.totalorder %s257, 15
      %s259 = scalar_select %p258, %s257, 15
      %s260 = smul.addr %s259, 4
      %s261 = scalar_lea.vmem %s5, %s260
      %s262 = smul.u32 8, %s18
      %s263 = smul.u32 8, %s18
      %p264 = scmp.lt.s32.totalorder %s263, 15
      %s265 = scalar_select %p264, %s263, 15
      %s266 = smul.addr %s265, 4
      %s267 = scalar_lea.vmem %s6, %s266
      %s268 = smul.u32 8, %s18
      %v270 = vld [vmem:[%s255] sm:$0xf]
      %v271 = vld [vmem:[%s255 + $0x4] sm:$0xf]
      %v272 = vld [vmem:[%s255 + $0x8] sm:$0xf]
      %v273 = vld [vmem:[%s255 + $0xc] sm:$0xf]
      %v274 = vld [vmem:[%s255 + $0x10] sm:$0xf]
      %v275 = vld [vmem:[%s255 + $0x14] sm:$0xf]
      %v276 = vld [vmem:[%s255 + $0x18] sm:$0xf]
      %v277 = vld [vmem:[%s255 + $0x1c] sm:$0xf]
      %v278 = vld [vmem:[%s1] sm:$0xf]
      %v279 = vld [vmem:[%s1 + $0x4] sm:$0xf]
      %v280 = vld [vmem:[%s1 + $0x8] sm:$0xf]
      %v281 = vld [vmem:[%s1 + $0xc] sm:$0xf]
      %v282 = vld [vmem:[%s1 + $0x10] sm:$0xf]
      %v283 = vld [vmem:[%s1 + $0x14] sm:$0xf]
      %v284 = vld [vmem:[%s1 + $0x18] sm:$0xf]
      %v285 = vld [vmem:[%s1 + $0x1c] sm:$0xf]
      %v286 = vld [vmem:[%s1 + $0x20] sm:$0xf]
      %v287 = vld [vmem:[%s1 + $0x24] sm:$0xf]
      %v288 = vld [vmem:[%s1 + $0x28] sm:$0xf]
      %v289 = vld [vmem:[%s1 + $0x2c] sm:$0xf]
      %v290 = vld [vmem:[%s1 + $0x30] sm:$0xf]
      %v291 = vld [vmem:[%s1 + $0x34] sm:$0xf]
      %v292 = vld [vmem:[%s1 + $0x38] sm:$0xf]
      %v293 = vld [vmem:[%s1 + $0x3c] sm:$0xf]
      %v302 = vunpack.c.l.b16 %v270
      %v303 = vunpack.c.l.b16 %v271
      %v304 = vunpack.c.l.b16 %v272
      %v305 = vunpack.c.l.b16 %v273
      %v306 = vunpack.c.l.b16 %v274
      %v307 = vunpack.c.l.b16 %v275
      %v308 = vunpack.c.l.b16 %v276
      %v309 = vunpack.c.l.b16 %v277
      %v310 = vpack.c.b16 %v303, %v302
      %v311 = vpack.c.b16 %v305, %v304
      %v312 = vpack.c.b16 %v307, %v306
      %v313 = vpack.c.b16 %v309, %v308
      %v334 = vunpack.c.l.b16 %v278
      %v335 = vunpack.c.l.b16 %v279
      %v336 = vunpack.c.l.b16 %v280
      %v337 = vunpack.c.l.b16 %v281
      %v338 = vunpack.c.l.b16 %v282
      %v339 = vunpack.c.l.b16 %v283
      %v340 = vunpack.c.l.b16 %v284
      %v341 = vunpack.c.l.b16 %v285
      %v342 = vunpack.c.l.b16 %v286
      %v343 = vunpack.c.l.b16 %v287
      %v344 = vunpack.c.l.b16 %v288
      %v345 = vunpack.c.l.b16 %v289
      %v346 = vunpack.c.l.b16 %v290
      %v347 = vunpack.c.l.b16 %v291
      %v348 = vunpack.c.l.b16 %v292
      %v349 = vunpack.c.l.b16 %v293
      %v350 = vpack.c.b16 %v335, %v334
      %v351 = vpack.c.b16 %v337, %v336
      %v352 = vpack.c.b16 %v339, %v338
      %v353 = vpack.c.b16 %v341, %v340
      %v354 = vpack.c.b16 %v343, %v342
      %v355 = vpack.c.b16 %v345, %v344
      %v356 = vpack.c.b16 %v347, %v346
      %v357 = vpack.c.b16 %v349, %v348
      %366 = vmatprep.subr.bf16.mxu0 0
      %367 = vmatpush1.bf16.msra.mxu0 %v357
      %368 = vmatprep.subr.bf16.mxu0 0
      %369 = vmatpush1.bf16.msra.mxu0 %v356
      %370 = vmatprep.subr.bf16.mxu0 0
      %371 = vmatpush1.bf16.msra.mxu0 %v355
      %372 = vmatprep.subr.bf16.mxu0 0
      %373 = vmatpush1.bf16.msra.mxu0 %v354
      %374 = vmatprep.subr.bf16.mxu0 0
      %375 = vmatpush1.bf16.msra.mxu0 %v353
      %376 = vmatprep.subr.bf16.mxu0 0
      %377 = vmatpush1.bf16.msra.mxu0 %v352
      %378 = vmatprep.subr.bf16.mxu0 0
      %379 = vmatpush1.bf16.msra.mxu0 %v351
      %380 = vmatprep.subr.bf16.mxu0 0
      %381 = vmatpush1.bf16.msra.mxu0 %v350
      %382 = vmatprep.subr.bf16.mxu0 0
      %383 = vmatpush2.bf16.msra.mxu0 0
      %384 = vmatprep.subr.bf16.mxu0 0
      %385 = vmatpush2.bf16.msra.mxu0 0
      %386 = vmatprep.subr.bf16.mxu0 0
      %387 = vmatpush2.bf16.msra.mxu0 0
      %388 = vmatprep.subr.bf16.mxu0 0
      %389 = vmatpush2.bf16.msra.mxu0 0
      %390 = vmatprep.subr.bf16.mxu0 0
      %391 = vmatpush2.bf16.msra.mxu0 0
      %392 = vmatprep.subr.bf16.mxu0 0
      %393 = vmatpush2.bf16.msra.mxu0 0
      %394 = vmatprep.subr.bf16.mxu0 0
      %395 = vmatpush2.bf16.msra.mxu0 0
      %396 = vmatprep.subr.bf16.mxu0 0
      %397 = vmatpush2.bf16.msra.mxu0 0
      %398 = vmatprep.mubr.bf16.mxu0 0
      %399 = vmatmul.mubr.bf16.gmra.mxu0 %v310
      %v400 = vpop.f32.mrf.mxu0
      %v401 = vadd.f32 0.0, %v400
      %v402 = vpop.f32.mrf.mxu0
      %v403 = vpop.f32.mrf.mxu0
      %v404 = vadd.f32 0.0, %v403
      %v405 = vpop.f32.mrf.mxu0
      %406 = vmatprep.mubr.bf16.mxu0 0
      %407 = vmatmul.mubr.bf16.gmra.mxu0 %v311
      %v408 = vpop.f32.mrf.mxu0
      %v409 = vadd.f32 0.0, %v408
      %v410 = vpop.f32.mrf.mxu0
      %v411 = vpop.f32.mrf.mxu0
      %v412 = vadd.f32 0.0, %v411
      %v413 = vpop.f32.mrf.mxu0
      %414 = vmatprep.mubr.bf16.mxu0 0
      %415 = vmatmul.mubr.bf16.gmra.mxu0 %v312
      %v416 = vpop.f32.mrf.mxu0
      %v417 = vadd.f32 0.0, %v416
      %v418 = vpop.f32.mrf.mxu0
      %v419 = vpop.f32.mrf.mxu0
      %v420 = vadd.f32 0.0, %v419
      %v421 = vpop.f32.mrf.mxu0
      %422 = vmatprep.mubr.bf16.mxu0 0
      %423 = vmatmul.mubr.bf16.gmra.mxu0 %v313
      %v424 = vpop.f32.mrf.mxu0
      %v425 = vadd.f32 0.0, %v424
      %v426 = vpop.f32.mrf.mxu0
      %v427 = vpop.f32.mrf.mxu0
      %v428 = vadd.f32 0.0, %v427
      %v429 = vpop.f32.mrf.mxu0
      %430 = vdwg.mxu0
      %v431 = vld [vmem:[%s3] sm:$0x1]
      %v433 = vlaneseq
      %v434 = vshrl.u32 %v433, 7
      %v435 = vsub.s32 0, %v434
      %v436 = vrot.slane %v431, %v435
      %v438 = vmul.f32 %v401, %v436
      %v439 = vmul.f32 %v404, %v436
      %v440 = vmul.f32 %v409, %v436
      %v441 = vmul.f32 %v412, %v436
      %v442 = vmul.f32 %v417, %v436
      %v443 = vmul.f32 %v420, %v436
      %v444 = vmul.f32 %v425, %v436
      %v445 = vmul.f32 %v428, %v436
      %v446 = vld [vmem:[%s4] sm:$0x1]
      %v448 = vlaneseq
      %v449 = vshrl.u32 %v448, 7
      %v450 = vsub.s32 0, %v449
      %v451 = vrot.slane %v446, %v450
      %v453 = vadd.f32 %v438, %v451
      %v454 = vadd.f32 %v439, %v451
      %v455 = vadd.f32 %v440, %v451
      %v456 = vadd.f32 %v441, %v451
      %v457 = vadd.f32 %v442, %v451
      %v458 = vadd.f32 %v443, %v451
      %v459 = vadd.f32 %v444, %v451
      %v460 = vadd.f32 %v445, %v451
      %v461 = vmax.f32 %v453, 0.0
      %v462 = vmax.f32 %v454, 0.0
      %v463 = vmax.f32 %v455, 0.0
      %v464 = vmax.f32 %v456, 0.0
      %v465 = vmax.f32 %v457, 0.0
      %v466 = vmax.f32 %v458, 0.0
      %v467 = vmax.f32 %v459, 0.0
      %v468 = vmax.f32 %v460, 0.0
      %v469 = vpack.c.bf16 %v462, %v461
      %v470 = vpack.c.bf16 %v464, %v463
      %v471 = vpack.c.bf16 %v466, %v465
      %v472 = vpack.c.bf16 %v468, %v467
      %v477 = vunpack.c.l.b16 %v469
      %v478 = vunpack.c.h.b16 %v469
      %v479 = vunpack.c.l.b16 %v470
      %v480 = vunpack.c.h.b16 %v470
      %v481 = vunpack.c.l.b16 %v471
      %v482 = vunpack.c.h.b16 %v471
      %v483 = vunpack.c.l.b16 %v472
      %v484 = vunpack.c.h.b16 %v472
      %v485 = vpack.c.b16 %v477, %v477
      %v486 = vpack.c.b16 %v478, %v478
      %v487 = vpack.c.b16 %v479, %v479
      %v488 = vpack.c.b16 %v480, %v480
      %v489 = vpack.c.b16 %v481, %v481
      %v490 = vpack.c.b16 %v482, %v482
      %v491 = vpack.c.b16 %v483, %v483
      %v492 = vpack.c.b16 %v484, %v484
      %501 = vst [vmem:[%s261] sm:$0xf] %v485
      %502 = vst [vmem:[%s261 + $0x4] sm:$0xf] %v486
      %503 = vst [vmem:[%s261 + $0x8] sm:$0xf] %v487
      %504 = vst [vmem:[%s261 + $0xc] sm:$0xf] %v488
      %505 = vst [vmem:[%s261 + $0x10] sm:$0xf] %v489
      %506 = vst [vmem:[%s261 + $0x14] sm:$0xf] %v490
      %507 = vst [vmem:[%s261 + $0x18] sm:$0xf] %v491
      %508 = vst [vmem:[%s261 + $0x1c] sm:$0xf] %v492
      %v509 = vld [vmem:[%s2] sm:$0xf]
      %v510 = vld [vmem:[%s2 + $0x4] sm:$0xf]
      %v511 = vld [vmem:[%s2 + $0x8] sm:$0xf]
      %v512 = vld [vmem:[%s2 + $0xc] sm:$0xf]
      %v513 = vld [vmem:[%s2 + $0x10] sm:$0xf]
      %v514 = vld [vmem:[%s2 + $0x14] sm:$0xf]
      %v515 = vld [vmem:[%s2 + $0x18] sm:$0xf]
      %v516 = vld [vmem:[%s2 + $0x1c] sm:$0xf]
      %v517 = vld [vmem:[%s2 + $0x20] sm:$0xf]
      %v518 = vld [vmem:[%s2 + $0x24] sm:$0xf]
      %v519 = vld [vmem:[%s2 + $0x28] sm:$0xf]
      %v520 = vld [vmem:[%s2 + $0x2c] sm:$0xf]
      %v521 = vld [vmem:[%s2 + $0x30] sm:$0xf]
      %v522 = vld [vmem:[%s2 + $0x34] sm:$0xf]
      %v523 = vld [vmem:[%s2 + $0x38] sm:$0xf]
      %v524 = vld [vmem:[%s2 + $0x3c] sm:$0xf]
      %v541 = vunpack.c.l.b16 %v509
      %v542 = vunpack.c.l.b16 %v510
      %v543 = vunpack.c.l.b16 %v511
      %v544 = vunpack.c.l.b16 %v512
      %v545 = vunpack.c.l.b16 %v513
      %v546 = vunpack.c.l.b16 %v514
      %v547 = vunpack.c.l.b16 %v515
      %v548 = vunpack.c.l.b16 %v516
      %v549 = vunpack.c.l.b16 %v517
      %v550 = vunpack.c.l.b16 %v518
      %v551 = vunpack.c.l.b16 %v519
      %v552 = vunpack.c.l.b16 %v520
      %v553 = vunpack.c.l.b16 %v521
      %v554 = vunpack.c.l.b16 %v522
      %v555 = vunpack.c.l.b16 %v523
      %v556 = vunpack.c.l.b16 %v524
      %v557 = vpack.c.b16 %v542, %v541
      %v558 = vpack.c.b16 %v544, %v543
      %v559 = vpack.c.b16 %v546, %v545
      %v560 = vpack.c.b16 %v548, %v547
      %v561 = vpack.c.b16 %v550, %v549
      %v562 = vpack.c.b16 %v552, %v551
      %v563 = vpack.c.b16 %v554, %v553
      %v564 = vpack.c.b16 %v556, %v555
      %573 = vmatprep.subr.bf16.mxu0 0
      %574 = vmatpush1.bf16.msra.mxu0 %v564
      %575 = vmatprep.subr.bf16.mxu0 0
      %576 = vmatpush1.bf16.msra.mxu0 %v563
      %577 = vmatprep.subr.bf16.mxu0 0
      %578 = vmatpush1.bf16.msra.mxu0 %v562
      %579 = vmatprep.subr.bf16.mxu0 0
      %580 = vmatpush1.bf16.msra.mxu0 %v561
      %581 = vmatprep.subr.bf16.mxu0 0
      %582 = vmatpush1.bf16.msra.mxu0 %v560
      %583 = vmatprep.subr.bf16.mxu0 0
      %584 = vmatpush1.bf16.msra.mxu0 %v559
      %585 = vmatprep.subr.bf16.mxu0 0
      %586 = vmatpush1.bf16.msra.mxu0 %v558
      %587 = vmatprep.subr.bf16.mxu0 0
      %588 = vmatpush1.bf16.msra.mxu0 %v557
      %589 = vmatprep.subr.bf16.mxu0 0
      %590 = vmatpush2.bf16.msra.mxu0 0
      %591 = vmatprep.subr.bf16.mxu0 0
      %592 = vmatpush2.bf16.msra.mxu0 0
      %593 = vmatprep.subr.bf16.mxu0 0
      %594 = vmatpush2.bf16.msra.mxu0 0
      %595 = vmatprep.subr.bf16.mxu0 0
      %596 = vmatpush2.bf16.msra.mxu0 0
      %597 = vmatprep.subr.bf16.mxu0 0
      %598 = vmatpush2.bf16.msra.mxu0 0
      %599 = vmatprep.subr.bf16.mxu0 0
      %600 = vmatpush2.bf16.msra.mxu0 0
      %601 = vmatprep.subr.bf16.mxu0 0
      %602 = vmatpush2.bf16.msra.mxu0 0
      %603 = vmatprep.subr.bf16.mxu0 0
      %604 = vmatpush2.bf16.msra.mxu0 0
      %605 = vmatprep.mubr.bf16.mxu0 0
      %606 = vmatmul.mubr.bf16.gmra.mxu0 %v310
      %v607 = vpop.f32.mrf.mxu0
      %v608 = vadd.f32 0.0, %v607
      %v609 = vpop.f32.mrf.mxu0
      %v610 = vpop.f32.mrf.mxu0
      %v611 = vadd.f32 0.0, %v610
      %v612 = vpop.f32.mrf.mxu0
      %613 = vmatprep.mubr.bf16.mxu0 0
      %614 = vmatmul.mubr.bf16.gmra.mxu0 %v311
      %v615 = vpop.f32.mrf.mxu0
      %v616 = vadd.f32 0.0, %v615
      %v617 = vpop.f32.mrf.mxu0
      %v618 = vpop.f32.mrf.mxu0
      %v619 = vadd.f32 0.0, %v618
      %v620 = vpop.f32.mrf.mxu0
      %621 = vmatprep.mubr.bf16.mxu0 0
      %622 = vmatmul.mubr.bf16.gmra.mxu0 %v312
      %v623 = vpop.f32.mrf.mxu0
      %v624 = vadd.f32 0.0, %v623
      %v625 = vpop.f32.mrf.mxu0
      %v626 = vpop.f32.mrf.mxu0
      %v627 = vadd.f32 0.0, %v626
      %v628 = vpop.f32.mrf.mxu0
      %629 = vmatprep.mubr.bf16.mxu0 0
      %630 = vmatmul.mubr.bf16.gmra.mxu0 %v313
      %v631 = vpop.f32.mrf.mxu0
      %v632 = vadd.f32 0.0, %v631
      %v633 = vpop.f32.mrf.mxu0
      %v634 = vpop.f32.mrf.mxu0
      %v635 = vadd.f32 0.0, %v634
      %v636 = vpop.f32.mrf.mxu0
      %637 = vdwg.mxu0
      %v638 = vpack.c.bf16 %v611, %v608
      %v639 = vpack.c.bf16 %v619, %v616
      %v640 = vpack.c.bf16 %v627, %v624
      %v641 = vpack.c.bf16 %v635, %v632
      %v646 = vunpack.c.l.b16 %v638
      %v647 = vunpack.c.h.b16 %v638
      %v648 = vunpack.c.l.b16 %v639
      %v649 = vunpack.c.h.b16 %v639
      %v650 = vunpack.c.l.b16 %v640
      %v651 = vunpack.c.h.b16 %v640
      %v652 = vunpack.c.l.b16 %v641
      %v653 = vunpack.c.h.b16 %v641
      %v654 = vpack.c.b16 %v646, %v646
      %v655 = vpack.c.b16 %v647, %v647
      %v656 = vpack.c.b16 %v648, %v648
      %v657 = vpack.c.b16 %v649, %v649
      %v658 = vpack.c.b16 %v650, %v650
      %v659 = vpack.c.b16 %v651, %v651
      %v660 = vpack.c.b16 %v652, %v652
      %v661 = vpack.c.b16 %v653, %v653
      %670 = vst [vmem:[%s267] sm:$0xf] %v654
      %671 = vst [vmem:[%s267 + $0x4] sm:$0xf] %v655
      %672 = vst [vmem:[%s267 + $0x8] sm:$0xf] %v656
      %673 = vst [vmem:[%s267 + $0xc] sm:$0xf] %v657
      %674 = vst [vmem:[%s267 + $0x10] sm:$0xf] %v658
      %675 = vst [vmem:[%s267 + $0x14] sm:$0xf] %v659
      %676 = vst [vmem:[%s267 + $0x18] sm:$0xf] %v660
      %677 = vst [vmem:[%s267 + $0x1c] sm:$0xf] %v661
      %s678 = smul.u32 8, %s18
      %p679 = scmp.lt.s32.totalorder %s678, 15
      %s680 = scalar_select %p679, %s678, 15
      %s681 = smul.addr %s680, 4
      %s682 = scalar_lea.vmem %s5, %s681
      %s683 = smul.u32 8, %s18
      %p684 = scmp.lt.s32.totalorder %s683, 15
      %s685 = scalar_select %p684, %s683, 15
      %s686 = smul.addr %s685, 4
      %s687 = scalar_lea.vmem %s6, %s686
      // Predicated region
      $region41: #{basic_block_forward.2} parent=39 // pred_check
        %p688 = pneg %p146
      $region42: #{basic_block_forward.2} parent=39 // pred_check_branch
        %690 = sbr.rel (%p688) target = $region44
      $region43: #{basic_block_forward.2} parent=39 // pred_region
        %s691 = smul.u32 8, %s18
      $region44: #{basic_block_forward.2} parent=39 // pred_fallthru
        _
      // Predicated region
      $region45: #{basic_block_forward.2} parent=39 // pred_check
        %p692 = pneg %p172
      $region46: #{basic_block_forward.2} parent=39 // pred_check_branch
        %694 = sbr.rel (%p692) target = $region48
      $region47: #{basic_block_forward.2} parent=39 // pred_region
        %s695 = smul.u32 8, %s18
      $region48: #{basic_block_forward.2} parent=39 // pred_fallthru
        _
    $region40: #{basic_block_forward.2} parent=5 // pred_fallthru
      _
    %p696 = scmp.le.s32.totalorder 2, %s13
    // Predicated region
    $region49: #{basic_block_forward.2} parent=5 // pred_check
      %p697 = pneg %p696
    $region50: #{basic_block_forward.2} parent=5 // pred_check_branch
      %699 = sbr.rel (%p697) target = $region52
    $region51: #{basic_block_forward.2} parent=5 // pred_region
      %s700 = ssub.s32 %s13, 2
      // Predicated region
      $region53: #{basic_block_forward.2} parent=51 // pred_check
        %p701 = pneg %p152
      $region54: #{basic_block_forward.2} parent=51 // pred_check_branch
        %703 = sbr.rel (%p701) target = $region56
      $region55: #{basic_block_forward.2} parent=51 // pred_region
        %s704 = smul.u32 8, %s19
        %p705 = scmp.lt.s32.totalorder %s704, 15
        %s706 = scalar_select %p705, %s704, 15
        %s707 = smul.addr %s706, 4
        %s708 = scalar_lea.vmem %s5, %s707
      $region56: #{basic_block_forward.2} parent=51 // pred_fallthru
        _
      // Predicated region
      $region57: #{basic_block_forward.2} parent=51 // pred_check
        %p709 = pneg %p178
      $region58: #{basic_block_forward.2} parent=51 // pred_check_branch
        %711 = sbr.rel (%p709) target = $region60
      $region59: #{basic_block_forward.2} parent=51 // pred_region
        %s712 = smul.u32 8, %s19
        %p713 = scmp.lt.s32.totalorder %s712, 15
        %s714 = scalar_select %p713, %s712, 15
        %s715 = smul.addr %s714, 4
        %s716 = scalar_lea.vmem %s6, %s715
      $region60: #{basic_block_forward.2} parent=51 // pred_fallthru
        _
    $region52: #{basic_block_forward.2} parent=5 // pred_fallthru
      _
  $region6: #{basic_block_forward.2} parent=0 // loop_footer
    %s17 = sadd.s32 1, %s13
  $region7: #{basic_block_forward.2} parent=0 // loop_footer_branch
    %12 = sbr.rel target = $region3
  $region8: #{basic_block_forward.2} parent=0 // loop_exit
    _

</llo_original>
